<compile_context>
chip_gen: v5e
topology: v5e:2x2
jax: 0.10.0
libtpu: 0.0.40
codegen_flags: <defaults>
</compile_context>

<pallas_src>
from functools import partial

import jax
import jax.numpy as jnp
from jax.experimental import pallas as pl
from jax.experimental.pallas import tpu as pltpu

IN_FEATURES = 16
HIDDEN = 32
OUT_FEATURES = 16


def _round_up(n, m):
    return ((n + m - 1) // m) * m


def _mlp_kernel(x_ref, w1_ref, b1_ref, w2_ref, b2_ref, o_ref):
    # Hot path: two MXU matmuls + bias + ReLU, all f32, all VMEM-resident.
    x = x_ref[...]
    h = jnp.dot(x, w1_ref[...], preferred_element_type=jnp.float32)
    h = jnp.maximum(h + b1_ref[...], 0.0)            # b1 is (1, HIDDEN), broadcasts
    y = jnp.dot(h, w2_ref[...], preferred_element_type=jnp.float32)
    o_ref[...] = (y + b2_ref[...]).astype(o_ref.dtype)   # (TB, 16) store


@partial(jax.jit, static_argnames=("tb",))
def toy_model_forward(x, w1, b1, w2, b2, *, tb=8192):
    """x: [B, 16] f32. w1: [16, 32], b1: [32], w2: [32, 16], b2: [16]."""
    B = x.shape[0]

    # Pad the batch to a multiple of 8 (sublane granularity) so every block
    # shape is legal even for tiny batches; slice the pad off at the end.
    B_pad = _round_up(max(B, 8), 8)
    if B_pad != B:
        x = jnp.pad(x, ((0, B_pad - B), (0, 0)))

    # Batch tile: big (amortize per-step overhead, large DMAs) but
    #  - at least 2 grid steps when the batch permits (v7x: feed both TCs)
    #  - a multiple of 8, never larger than the padded batch
    #  - capped at `tb` so double-buffered x/out tiles stay well inside the
    #    32 MiB scoped-VMEM default (x + out ~= 1 KiB/row padded to lanes,
    #    double-buffered ~2 KiB/row -> tb=8192 ~ 17 MiB).
    TB = min(tb, max(8, _round_up(-(-B_pad // 2), 8)))
    TB = min(TB, B_pad)
    grid = (pl.cdiv(B_pad, TB),)

    # Biases as (1, N) tiles (trivial, 128/64-byte reshapes; fused under jit).
    b1_2d = b1.reshape(1, HIDDEN)
    b2_2d = b2.reshape(1, OUT_FEATURES)

    const = lambda i: (0, 0)   # weights/biases stay VMEM-resident across the grid
    bytes_accessed = 4 * (B_pad * IN_FEATURES + B_pad * OUT_FEATURES
                          + IN_FEATURES * HIDDEN + HIDDEN
                          + HIDDEN * OUT_FEATURES + OUT_FEATURES)

    out = pl.pallas_call(
        _mlp_kernel,
        out_shape=jax.ShapeDtypeStruct((B_pad, OUT_FEATURES), x.dtype),
        grid=grid,
        in_specs=[
            pl.BlockSpec((TB, IN_FEATURES), lambda i: (i, 0)),   # x: tiled over batch
            pl.BlockSpec((IN_FEATURES, HIDDEN), const),          # w1
            pl.BlockSpec((1, HIDDEN), const),                    # b1
            pl.BlockSpec((HIDDEN, OUT_FEATURES), const),         # w2
            pl.BlockSpec((1, OUT_FEATURES), const),              # b2
        ],
        out_specs=pl.BlockSpec((TB, OUT_FEATURES), lambda i: (i, 0)),
        compiler_params=pltpu.CompilerParams(
            dimension_semantics=("parallel",)),                  # v7x: 2 TCs
        cost_estimate=pl.CostEstimate(
            flops=2 * B_pad * (IN_FEATURES * HIDDEN + HIDDEN * OUT_FEATURES),
            transcendentals=0,
            bytes_accessed=bytes_accessed),
    )(x, w1, b1_2d, w2, b2_2d)

    if B_pad != B:
        out = out[:B]
    return out


def toy_model_reference(x, w1, b1, w2, b2):
    h = jnp.maximum(x @ w1 + b1, 0.0)
    return h @ w2 + b2


def init_params(key):
    """Deterministic init mimicking nn.Linear's uniform(-1/sqrt(fan_in), +)."""
    k1, k2, k3, k4 = jax.random.split(key, 4)
    bound1 = 1.0 / jnp.sqrt(IN_FEATURES)
    bound2 = 1.0 / jnp.sqrt(HIDDEN)
    # PyTorch stores weight [out, in]; we keep the transposed [in, out] form.
    w1 = jax.random.uniform(k1, (IN_FEATURES, HIDDEN), jnp.float32,
                            minval=-bound1, maxval=bound1)
    b1 = jax.random.uniform(k2, (HIDDEN,), jnp.float32,
                            minval=-bound1, maxval=bound1)
    w2 = jax.random.uniform(k3, (HIDDEN, OUT_FEATURES), jnp.float32,
                            minval=-bound2, maxval=bound2)
    b2 = jax.random.uniform(k4, (OUT_FEATURES,), jnp.float32,
                            minval=-bound2, maxval=bound2)
    return w1, b1, w2, b2


if __name__ == "__main__":
    key = jax.random.PRNGKey(0)
    kx, kp = jax.random.split(key)
    w1, b1, w2, b2 = init_params(kp)

    # Small shape consistent with the module: [batch=8, in_features=16].
    batch = 8
    x = jax.random.normal(kx, (batch, IN_FEATURES), jnp.float32)
    out = jax.block_until_ready(toy_model_forward(x, w1, b1, w2, b2))
    ref = toy_model_reference(x, w1, b1, w2, b2)
    assert out.shape == (batch, OUT_FEATURES)
    assert jnp.allclose(out, ref, atol=1e-5, rtol=1e-5)

    # Multi-step batch grid (B=384 -> TB=192, grid=(2,)).
    x2 = jax.random.normal(kx, (384, IN_FEATURES), jnp.float32)
    out2 = jax.block_until_ready(toy_model_forward(x2, w1, b1, w2, b2))
    ref2 = toy_model_reference(x2, w1, b1, w2, b2)
    assert out2.shape == (384, OUT_FEATURES)
    assert jnp.allclose(out2, ref2, atol=1e-5, rtol=1e-5)

    # Ragged / tiny batch path (B=2 -> padded to 8 internally, sliced back).
    x3 = jax.random.normal(kx, (2, IN_FEATURES), jnp.float32)
    out3 = jax.block_until_ready(toy_model_forward(x3, w1, b1, w2, b2))
    ref3 = toy_model_reference(x3, w1, b1, w2, b2)
    assert out3.shape == (2, OUT_FEATURES)
    assert jnp.allclose(out3, ref3, atol=1e-5, rtol=1e-5)

    print("KERNEL_OK")
</pallas_src>

<mosaic_0001>
module attributes {stable_mosaic.version = 11 : i64} {
  func.func @_mlp_kernel(%arg0: i32, %arg1: memref<8x16xf32, #tpu.memory_space<vmem>>, %arg2: memref<16x32xf32, #tpu.memory_space<vmem>>, %arg3: memref<1x32xf32, #tpu.memory_space<vmem>>, %arg4: memref<32x16xf32, #tpu.memory_space<vmem>>, %arg5: memref<1x16xf32, #tpu.memory_space<vmem>>, %arg6: memref<8x16xf32, #tpu.memory_space<vmem>>) attributes {dimension_semantics = [#tpu.dimension_semantics<parallel>], iteration_bounds = array<i64: 1>, scalar_prefetch = 0 : i64, scratch_operands = 0 : i64, tpu.core_type = #tpu.core_type<tc>, window_params = [{transform_indices = @transform_0, window_bounds = array<i64: 8, 16>}, {pipeline_mode = #tpu.pipeline_mode<synchronous>, transform_indices = @transform_1, window_bounds = array<i64: 16, 32>}, {pipeline_mode = #tpu.pipeline_mode<synchronous>, transform_indices = @transform_2, window_bounds = array<i64: 1, 32>}, {pipeline_mode = #tpu.pipeline_mode<synchronous>, transform_indices = @transform_3, window_bounds = array<i64: 32, 16>}, {pipeline_mode = #tpu.pipeline_mode<synchronous>, transform_indices = @transform_4, window_bounds = array<i64: 1, 16>}, {transform_indices = @transform_5, window_bounds = array<i64: 8, 16>}]} {
    %c0 = arith.constant 0 : index
    %c0_0 = arith.constant 0 : index
    %0 = vector.load %arg1[%c0, %c0_0] : memref<8x16xf32, #tpu.memory_space<vmem>>, vector<8x16xf32>
    %c0_1 = arith.constant 0 : index
    %c0_2 = arith.constant 0 : index
    %1 = vector.load %arg2[%c0_1, %c0_2] : memref<16x32xf32, #tpu.memory_space<vmem>>, vector<16x32xf32>
    %cst = arith.constant dense<0.000000e+00> : vector<8x32xf32>
    %2 = tpu.matmul %0, %1, %cst {dimension_numbers = #tpu.dot_dimension_numbers<[1], [0], [0], [1], [0, 0, 1, 1], [], []>} : vector<8x16xf32>, vector<16x32xf32>, vector<8x32xf32> -> vector<8x32xf32>
    %c0_3 = arith.constant 0 : index
    %c0_4 = arith.constant 0 : index
    %3 = vector.load %arg3[%c0_3, %c0_4] : memref<1x32xf32, #tpu.memory_space<vmem>>, vector<1x32xf32>
    %4 = vector.broadcast %3 : vector<1x32xf32> to vector<8x32xf32>
    %5 = arith.addf %2, %4 : vector<8x32xf32>
    %cst_5 = arith.constant 0.000000e+00 : f32
    %6 = vector.broadcast %cst_5 : f32 to vector<8x32xf32>
    %7 = arith.maximumf %5, %6 : vector<8x32xf32>
    %c0_6 = arith.constant 0 : index
    %c0_7 = arith.constant 0 : index
    %8 = vector.load %arg4[%c0_6, %c0_7] : memref<32x16xf32, #tpu.memory_space<vmem>>, vector<32x16xf32>
    %cst_8 = arith.constant dense<0.000000e+00> : vector<8x16xf32>
    %9 = tpu.matmul %7, %8, %cst_8 {dimension_numbers = #tpu.dot_dimension_numbers<[1], [0], [0], [1], [0, 0, 1, 1], [], []>} : vector<8x32xf32>, vector<32x16xf32>, vector<8x16xf32> -> vector<8x16xf32>
    %c0_9 = arith.constant 0 : index
    %c0_10 = arith.constant 0 : index
    %10 = vector.load %arg5[%c0_9, %c0_10] : memref<1x16xf32, #tpu.memory_space<vmem>>, vector<1x16xf32>
    %11 = vector.broadcast %10 : vector<1x16xf32> to vector<8x16xf32>
    %12 = arith.addf %9, %11 : vector<8x16xf32>
    %c0_11 = arith.constant 0 : index
    %c0_12 = arith.constant 0 : index
    %13 = vector.load %arg6[%c0_11, %c0_12] : memref<8x16xf32, #tpu.memory_space<vmem>>, vector<8x16xf32>
    tpu.vector_store %arg6[%c0_11, %c0_12], %12 {strides = array<i32>} : memref<8x16xf32, #tpu.memory_space<vmem>>, vector<8x16xf32>,
    return
  }
  func.func @transform_0(%arg0: i32) -> (i32, i32) {
    %c0_i32 = arith.constant 0 : i32
    %c0_i32_0 = arith.constant 0 : i32
    return %arg0, %c0_i32 : i32, i32
  }
  func.func @transform_1(%arg0: i32) -> (i32, i32) {
    %c0_i32 = arith.constant 0 : i32
    %c0_i32_0 = arith.constant 0 : i32
    %c0_i32_1 = arith.constant 0 : i32
    return %c0_i32, %c0_i32_0 : i32, i32
  }
  func.func @transform_2(%arg0: i32) -> (i32, i32) {
    %c0_i32 = arith.constant 0 : i32
    %c0_i32_0 = arith.constant 0 : i32
    %c0_i32_1 = arith.constant 0 : i32
    return %c0_i32, %c0_i32_0 : i32, i32
  }
  func.func @transform_3(%arg0: i32) -> (i32, i32) {
    %c0_i32 = arith.constant 0 : i32
    %c0_i32_0 = arith.constant 0 : i32
    %c0_i32_1 = arith.constant 0 : i32
    return %c0_i32, %c0_i32_0 : i32, i32
  }
  func.func @transform_4(%arg0: i32) -> (i32, i32) {
    %c0_i32 = arith.constant 0 : i32
    %c0_i32_0 = arith.constant 0 : i32
    %c0_i32_1 = arith.constant 0 : i32
    return %c0_i32, %c0_i32_0 : i32, i32
  }
  func.func @transform_5(%arg0: i32) -> (i32, i32) {
    %c0_i32 = arith.constant 0 : i32
    %c0_i32_0 = arith.constant 0 : i32
    return %arg0, %c0_i32 : i32, i32
  }
}

</mosaic_0001>

<llo_original>
// kernel: toy_model_forward.1
$region0: #{toy_model_forward.1}
  #allocation0 [shape = 'u32[]', space=smem, size = 0x4, offset = 0x4, fixed_abs, tag = 'smem constant byte address 0x4 - core index']
  #allocation1 [shape = 'u32[72,128]{1,0:T(1,128)}', space=vmem, size = 0x9000, scoped, tag = 'internal scratch']
  %s0 = inlined_call_operand.vmem [shape: f32[8,16], index: 0, kind: input, shape index: {}]
  %s1 = inlined_call_operand.vmem [shape: f32[16,32], index: 1, kind: input, shape index: {}]
  %s2 = inlined_call_operand.vmem [shape: f32[1,32], index: 2, kind: input, shape index: {}]
  %s3 = inlined_call_operand.vmem [shape: f32[32,16], index: 3, kind: input, shape index: {}]
  %s4 = inlined_call_operand.vmem [shape: f32[1,16], index: 4, kind: input, shape index: {}]
  %s5 = inlined_call_operand.hbm [shape: f32[8,16], index: 5, kind: output, shape index: {}]
  %s6 = sld [smem:[#allocation0]]
  $region30: #{toy_model_forward.1} parent=0
    _
  %s8 = ssub.s32 1, %s6
  %s9 = scalar_select 0, %s8, %s6
  $region1: #{toy_model_forward.1} parent=0
    #allocation2 [shape = 'u8[4096]{0}', space=vmem, size = 0x1000, scoped, tag = 'output window, operand 0, single buffered']
    #allocation3 [shape = 's32[1]{0}', space=sflag, size = 0x4, scoped, tag = 'scoped memory for toy_model_forward.1']
    %10 = vsyncpa [#allocation3], 0
    // Predicated region
    $region2: #{toy_model_forward.1} parent=1 // pred_check
      _
    $region3: #{toy_model_forward.1} parent=1 // pred_check_branch
      %12 = sbr.rel (0) target = $region5
    $region4: #{toy_model_forward.1} parent=1 // pred_region
      _
    $region5: #{toy_model_forward.1} parent=1 // pred_fallthru
      _
    // Predicated region
    $region6: #{toy_model_forward.1} parent=1 // pred_check
      _
    $region7: #{toy_model_forward.1} parent=1 // pred_check_branch
      %14 = sbr.rel (0) target = $region9
    $region8: #{toy_model_forward.1} parent=1 // pred_region
      _
    $region9: #{toy_model_forward.1} parent=1 // pred_fallthru
      _
    // Predicated region
    $region10: #{toy_model_forward.1} parent=1 // pred_check
      _
    $region11: #{toy_model_forward.1} parent=1 // pred_check_branch
      %16 = sbr.rel (0) target = $region13
    $region12: #{toy_model_forward.1} parent=1 // pred_region
      _
    $region13: #{toy_model_forward.1} parent=1 // pred_fallthru
      _
    // Predicated region
    $region14: #{toy_model_forward.1} parent=1 // pred_check
      _
    $region15: #{toy_model_forward.1} parent=1 // pred_check_branch
      %18 = sbr.rel (0) target = $region17
    $region16: #{toy_model_forward.1} parent=1 // pred_region
      _
    $region17: #{toy_model_forward.1} parent=1 // pred_fallthru
      _
    // Predicated region
    $region18: #{toy_model_forward.1} parent=1 // pred_check
      _
    $region19: #{toy_model_forward.1} parent=1 // pred_check_branch
      %20 = sbr.rel (0) target = $region21
    $region20: #{toy_model_forward.1} parent=1 // pred_region
      _
    $region21: #{toy_model_forward.1} parent=1 // pred_fallthru
      _
    %v21 = vld [vmem:[%s0] sm:$0xff]
    %v22 = vld [vmem:[%s1] sm:$0xff]
    %v23 = vld [vmem:[%s1 + $0x8] sm:$0xff]
    %v24 = vld [vmem:[%s2] sm:$0x1]
    %v26 = vperm.slane %v24, 0
    %vm28 = vcmask 130048
    %v30 = vsel %vm28, %v21, 0
    %32 = vmatpush.msra.mxu0 0.0
    %33 = vmatpush.msra.mxu0 0.0
    %34 = vmatpush.msra.mxu0 0.0
    %35 = vmatpush.msra.mxu0 0.0
    %36 = vmatpush.msra.mxu0 0.0
    %37 = vmatpush.msra.mxu0 0.0
    %38 = vmatpush.msra.mxu0 0.0
    %39 = vmatpush.msra.mxu0 0.0
    %40 = vmatpush.msra.mxu0 0.0
    %41 = vmatpush.msra.mxu0 0.0
    %42 = vmatpush.msra.mxu0 0.0
    %43 = vmatpush.msra.mxu0 0.0
    %44 = vmatpush.msra.mxu0 0.0
    %45 = vmatpush.msra.mxu0 0.0
    %46 = vmatpush.msra.mxu0 %v23
    %47 = vmatpush.msra.mxu0 %v22
    %48 = vmatmul.f32.gmra.mxu0 %v30
    %v49 = vpop.f32.mrf.mxu0
    %v50 = vadd.f32 %v26, %v49
    %51 = vdwg.mxu0
    %v52 = vmax.f32 %v50, 0.0
    %v53 = vld [vmem:[%s3] sm:$0xff]
    %v54 = vld [vmem:[%s3 + $0x8] sm:$0xff]
    %v55 = vld [vmem:[%s3 + $0x10] sm:$0xff]
    %v56 = vld [vmem:[%s3 + $0x18] sm:$0xff]
    %v57 = vld [vmem:[%s4] sm:$0x1]
    %v59 = vperm.slane %v57, 0
    %vm61 = vcmask 261120
    %v63 = vsel %vm61, %v52, 0
    %65 = vmatpush.msra.mxu0 0.0
    %66 = vmatpush.msra.mxu0 0.0
    %67 = vmatpush.msra.mxu0 0.0
    %68 = vmatpush.msra.mxu0 0.0
    %69 = vmatpush.msra.mxu0 0.0
    %70 = vmatpush.msra.mxu0 0.0
    %71 = vmatpush.msra.mxu0 0.0
    %72 = vmatpush.msra.mxu0 0.0
    %73 = vmatpush.msra.mxu0 0.0
    %74 = vmatpush.msra.mxu0 0.0
    %75 = vmatpush.msra.mxu0 0.0
    %76 = vmatpush.msra.mxu0 0.0
    %77 = vmatpush.msra.mxu0 %v56
    %78 = vmatpush.msra.mxu0 %v55
    %79 = vmatpush.msra.mxu0 %v54
    %80 = vmatpush.msra.mxu0 %v53
    %81 = vmatmul.f32.gmra.mxu0 %v63
    %v82 = vpop.f32.mrf.mxu0
    %v83 = vadd.f32 %v59, %v82
    %84 = vdwg.mxu0
    %85 = vst.msk [vmem:[#allocation2] sm:$0xff] %vm28, %v83
    // Predicated region
    $region22: #{toy_model_forward.1} parent=1 // pred_check
      _
    $region23: #{toy_model_forward.1} parent=1 // pred_check_branch
      %87 = sbr.rel (0) target = $region25
    $region24: #{toy_model_forward.1} parent=1 // pred_region
      %89 = vsyncadd [#allocation3], 0
      %s91 = sshll.u32 [#allocation2], 4
      %s92 = int_to_ptr.vmem [resolvable:$true] %s91
      %s93 = sshll.u32 %s5, 4
      %s94 = int_to_ptr.hbm [resolvable:$true] %s93
      %96 = dma.vmem_to_hbm [thread:$0]  %s92, 128, %s94, [#allocation3]
    $region25: #{toy_model_forward.1} parent=1 // pred_fallthru
      _
    // Predicated region
    $region26: #{toy_model_forward.1} parent=1 // pred_check
      _
    $region27: #{toy_model_forward.1} parent=1 // pred_check_branch
      %98 = sbr.rel (0) target = $region29
    $region28: #{toy_model_forward.1} parent=1 // pred_region
      %100 = dma.done [#allocation3], 128
    $region29: #{toy_model_forward.1} parent=1 // pred_fallthru
      _
    %101 = vsyncpa [#allocation3], 1

</llo_original>
